<compile_context>
chip_gen: v5e
topology: v5e:2x2
jax: 0.10.0
libtpu: 0.0.40
codegen_flags: <defaults>
</compile_context>

<pallas_src>
import jax
import jax.numpy as jnp
from jax.experimental import pallas as pl
from jax.experimental.pallas import tpu as pltpu


def embed_kernel(ids_ref, word_ref, pos_ref, w_ref, b_ref, out_ref):
    """One grid step: tm tokens -> (tm, H) output rows.

    word gather (one-hot MXU matmul) -> + position rows -> LayerNorm (affine
    folded into w_ref/b_ref by the wrapper) -> Linear (MXU).  Dropout: eval
    mode -> identity.
    """
    tm = ids_ref.shape[0]
    V = word_ref.shape[0]

    # --- word embedding gather as one-hot matmul on the MXU (exact 0/1 operand).
    ids = ids_ref[...]                                          # (tm, 1) int32
    one_hot = (jax.lax.broadcasted_iota(jnp.int32, (tm, V), 1) == ids)
    one_hot = one_hot.astype(word_ref.dtype)                    # exact 0/1 in bf16
    x = jnp.dot(one_hot, word_ref[...], preferred_element_type=jnp.float32)

    # --- position embedding: per-token rows already laid out in pos_ref.
    x = x + pos_ref[...].astype(jnp.float32)

    # --- LayerNorm over the embedding dim (eps=1e-12), f32, one-pass mean/var.
    mean = jnp.mean(x, axis=-1, keepdims=True)
    mean_sq = jnp.mean(x * x, axis=-1, keepdims=True)
    var = jnp.maximum(mean_sq - mean * mean, 0.0)
    x = (x - mean) * jax.lax.rsqrt(var + 1e-12)

    # Dropout: inference (eval) mode -> identity.
    # TODO(synk): training-mode dropout would use pltpu.prng_seed / stateful_bernoulli.

    # --- hidden_mapping Linear on the MXU (gamma folded into w_ref, beta@W + b
    # folded into b_ref by the wrapper).
    y = jnp.dot(x.astype(w_ref.dtype), w_ref[...], preferred_element_type=jnp.float32)
    out_ref[...] = (y + b_ref[...]).astype(out_ref.dtype)


def _choose_tm(n_tokens: int, seq_len: int, max_tile: int = 1024) -> int:
    """Largest power-of-2 multiple of seq_len that divides n_tokens, stays under
    max_tile tokens, and keeps >= 2 grid steps (so both v7x TensorCores get work)."""
    tm = seq_len
    while (tm * 2 <= max_tile
           and n_tokens % (tm * 2) == 0
           and n_tokens // (tm * 2) >= 2):
        tm *= 2
    return min(tm, n_tokens)


def embed_forward(input_ids, word_table, pos_table, gamma, beta, w_t, bias,
                  tm=None, table_dtype=jnp.bfloat16, out_dtype=jnp.float32):
    """Forward pass of `Embed`.

    input_ids : [B, S] int32
    word_table: [V, D] f32   (nn.Embedding weight)
    pos_table : [P, D] f32   (P >= S)
    gamma/beta: [D]    f32   (LayerNorm affine)
    w_t       : [D, H] f32   (transpose of nn.Linear weight [H, D])
    bias      : [H]    f32
    Returns [B, S, H] in `out_dtype` (f32 matches the PyTorch module; bf16
    halves the HBM writeback if downstream accepts it).
    """
    B, S = input_ids.shape
    V, D = word_table.shape
    P = pos_table.shape[0]
    H = w_t.shape[1]
    N = B * S
    assert P >= S, "sequence longer than max_position_embeddings"

    if tm is None:
        tm = _choose_tm(N, S)
    assert N % tm == 0, "token tile must divide B*S"
    assert tm % 8 == 0 or tm == N, "token tile must be sublane (8) aligned"

    ids_flat = input_ids.reshape(N, 1).astype(jnp.int32)
    word_tbl = word_table.astype(table_dtype)

    # Fold the LayerNorm affine into the Linear (wrapper-side, one-time, f32):
    #   (x_norm * g + b) @ W + c  ==  x_norm @ (g[:, None] * W) + (b @ W + c)
    g32 = gamma.astype(jnp.float32)
    b32 = beta.astype(jnp.float32)
    w32 = w_t.astype(jnp.float32)
    w_fold = (g32[:, None] * w32).astype(table_dtype)               # [D, H]
    b_fold = (b32 @ w32 + bias.astype(jnp.float32)).reshape(1, H)   # [1, H] f32

    # Position rows per tile (no gather / modulo / one-hot needed).
    if tm % S == 0:
        # Tile holds whole sequences: the position pattern is identical for
        # every grid step -> one resident (tm, D) block, fetched once.
        pos_in = jnp.tile(pos_table[:S].astype(table_dtype), (tm // S, 1))
        pos_spec = pl.BlockSpec((tm, D), lambda i: (0, 0))
    elif S % tm == 0:
        # Tile is a contiguous slice of one sequence: positions are a cyclic
        # BlockSpec slice of the table (VMEM tile re-used when the index repeats).
        period = S // tm
        pos_in = pos_table[:S].astype(table_dtype)
        pos_spec = pl.BlockSpec((tm, D), lambda i: (i % period, 0))
    else:
        raise ValueError("token tile must divide S or be a multiple of S")

    # VMEM budget: resident tables + double-buffered streams + in-kernel intermediates.
    itm_tbl = jnp.dtype(table_dtype).itemsize
    itm_out = jnp.dtype(out_dtype).itemsize
    resident = (word_tbl.size + pos_in.size + w_fold.size) * itm_tbl + H * 4
    streamed = tm * 4 + tm * H * itm_out
    interm = tm * (V + 6 * D + 2 * H) * 4
    vmem_limit = int(min(max(2 * (resident + streamed) + interm, 32 * 1024 * 1024),
                         64 * 1024 * 1024))

    out = pl.pallas_call(
        embed_kernel,
        out_shape=jax.ShapeDtypeStruct((N, H), out_dtype),
        grid_spec=pltpu.PrefetchScalarGridSpec(
            num_scalar_prefetch=0,
            grid=(N // tm,),
            in_specs=[
                pl.BlockSpec((tm, 1), lambda i: (i, 0)),   # token-id tile
                pl.BlockSpec((V, D), lambda i: (0, 0)),    # word table (resident, bf16)
                pos_spec,                                  # per-token position rows
                pl.BlockSpec((D, H), lambda i: (0, 0)),    # gamma-folded W^T (bf16)
                pl.BlockSpec((1, H), lambda i: (0, 0)),    # beta/bias-folded bias (f32)
            ],
            out_specs=pl.BlockSpec((tm, H), lambda i: (i, 0)),
        ),
        compiler_params=pltpu.CompilerParams(
            dimension_semantics=("parallel",),
            vmem_limit_bytes=vmem_limit,
        ),
    )(ids_flat, word_tbl, pos_in, w_fold, b_fold)
    return out.reshape(B, S, H)


def _trunc_normal(key, shape, std=0.02):
    # trunc_normal_(mean=0, std=0.02, a=-0.04, b=0.04) == 2-sigma truncated normal.
    return jax.random.truncated_normal(key, -2.0, 2.0, shape, jnp.float32) * std


if __name__ == "__main__":
    # Small, module-consistent, lane-aligned demo shapes (ImageGPT-style codebook).
    vocab_size = 256
    embed_dim = 128
    max_position_embeddings = 64
    hidden_size = 256
    B, S = 2, 16

    root = jax.random.PRNGKey(0)
    k_ids, k_word, k_pos, k_g, k_be, k_w, k_b = jax.random.split(root, 7)

    input_ids = jax.random.randint(k_ids, (B, S), 0, vocab_size, dtype=jnp.int32)

    # Deterministic parameter init (mirrors shapes / init scheme of the module;
    # gamma/beta get small perturbations to exercise the affine-fold path).
    word_table = _trunc_normal(k_word, (vocab_size, embed_dim))
    pos_table = _trunc_normal(k_pos, (max_position_embeddings, embed_dim))
    gamma = 1.0 + 0.05 * jax.random.normal(k_g, (embed_dim,), jnp.float32)
    beta = 0.02 * jax.random.normal(k_be, (embed_dim,), jnp.float32)
    # nn.Linear stores weight as [H, D]; the kernel consumes the transpose [D, H].
    w_hd = _trunc_normal(k_w, (hidden_size, embed_dim))
    bias = (jax.random.uniform(k_b, (hidden_size,), jnp.float32) - 0.5) * (
        2.0 / jnp.sqrt(embed_dim)
    )
    w_t = w_hd.T

    out = embed_forward(input_ids, word_table, pos_table, gamma, beta, w_t, bias)
    out = jax.block_until_ready(out)

    # Pure-JAX f32 reference of the module forward (dropout in eval mode = identity).
    ref = word_table[input_ids] + pos_table[jnp.arange(S)][None, :, :]
    mean = ref.mean(-1, keepdims=True)
    var = ((ref - mean) ** 2).mean(-1, keepdims=True)
    ref = (ref - mean) * jax.lax.rsqrt(var + 1e-12) * gamma + beta
    ref = ref @ w_t + bias

    assert out.shape == (B, S, hidden_size)
    # bf16 MXU operands -> compare against the f32 module math with matching tolerance.
    assert jnp.allclose(out, ref, atol=2e-2, rtol=2e-2), (
        "mismatch vs reference: max abs err "
        f"{float(jnp.max(jnp.abs(out - ref)))}"
    )

    print("KERNEL_OK")
</pallas_src>

<mosaic_0001>
module attributes {stable_mosaic.version = 11 : i64} {
  func.func @embed_kernel(%arg0: i32, %arg1: memref<16x1xi32, #tpu.memory_space<vmem>>, %arg2: memref<256x128xbf16, #tpu.memory_space<vmem>>, %arg3: memref<16x128xbf16, #tpu.memory_space<vmem>>, %arg4: memref<128x256xbf16, #tpu.memory_space<vmem>>, %arg5: memref<1x256xf32, #tpu.memory_space<vmem>>, %arg6: memref<16x256xf32, #tpu.memory_space<vmem>>) attributes {dimension_semantics = [#tpu.dimension_semantics<parallel>], iteration_bounds = array<i64: 2>, scalar_prefetch = 0 : i64, scratch_operands = 0 : i64, tpu.core_type = #tpu.core_type<tc>, window_params = [{transform_indices = @transform_0, window_bounds = array<i64: 16, 1>}, {pipeline_mode = #tpu.pipeline_mode<synchronous>, transform_indices = @transform_1, window_bounds = array<i64: 256, 128>}, {pipeline_mode = #tpu.pipeline_mode<synchronous>, transform_indices = @transform_2, window_bounds = array<i64: 16, 128>}, {pipeline_mode = #tpu.pipeline_mode<synchronous>, transform_indices = @transform_3, window_bounds = array<i64: 128, 256>}, {pipeline_mode = #tpu.pipeline_mode<synchronous>, transform_indices = @transform_4, window_bounds = array<i64: 1, 256>}, {transform_indices = @transform_5, window_bounds = array<i64: 16, 256>}]} {
    %c0 = arith.constant 0 : index
    %c0_0 = arith.constant 0 : index
    %0 = vector.load %arg1[%c0, %c0_0] : memref<16x1xi32, #tpu.memory_space<vmem>>, vector<16x1xi32>
    %1 = tpu.iota {dimensions = array<i32: 1>} : vector<16x256xi32>
    %2 = vector.broadcast %0 : vector<16x1xi32> to vector<16x256xi32>
    %3 = arith.cmpi eq, %1, %2 : vector<16x256xi32>
    %4 = arith.extui %3 : vector<16x256xi1> to vector<16x256xi32>
    %5 = arith.sitofp %4 : vector<16x256xi32> to vector<16x256xf32>
    %6 = arith.truncf %5 : vector<16x256xf32> to vector<16x256xbf16>
    %c0_1 = arith.constant 0 : index
    %c0_2 = arith.constant 0 : index
    %7 = vector.load %arg2[%c0_1, %c0_2] : memref<256x128xbf16, #tpu.memory_space<vmem>>, vector<256x128xbf16>
    %cst = arith.constant dense<0.000000e+00> : vector<16x128xf32>
    %8 = tpu.matmul %6, %7, %cst {dimension_numbers = #tpu.dot_dimension_numbers<[1], [0], [0], [1], [0, 0, 1, 1], [], []>} : vector<16x256xbf16>, vector<256x128xbf16>, vector<16x128xf32> -> vector<16x128xf32>
    %c0_3 = arith.constant 0 : index
    %c0_4 = arith.constant 0 : index
    %9 = vector.load %arg3[%c0_3, %c0_4] : memref<16x128xbf16, #tpu.memory_space<vmem>>, vector<16x128xbf16>
    %10 = arith.extf %9 : vector<16x128xbf16> to vector<16x128xf32>
    %11 = arith.addf %8, %10 : vector<16x128xf32>
    %cst_5 = arith.constant dense<0.000000e+00> : vector<16xf32>
    %12 = vector.multi_reduction <add>, %11, %cst_5 [1] : vector<16x128xf32> to vector<16xf32>
    %13 = vector.shape_cast %12 : vector<16xf32> to vector<16x1xf32>
    %cst_6 = arith.constant 1.280000e+02 : f32
    %14 = vector.broadcast %cst_6 : f32 to vector<16x1xf32>
    %15 = arith.divf %13, %14 : vector<16x1xf32>
    %16 = arith.mulf %11, %11 : vector<16x128xf32>
    %cst_7 = arith.constant dense<0.000000e+00> : vector<16xf32>
    %17 = vector.multi_reduction <add>, %16, %cst_7 [1] : vector<16x128xf32> to vector<16xf32>
    %18 = vector.shape_cast %17 : vector<16xf32> to vector<16x1xf32>
    %cst_8 = arith.constant 1.280000e+02 : f32
    %19 = vector.broadcast %cst_8 : f32 to vector<16x1xf32>
    %20 = arith.divf %18, %19 : vector<16x1xf32>
    %21 = arith.mulf %15, %15 : vector<16x1xf32>
    %22 = arith.subf %20, %21 : vector<16x1xf32>
    %cst_9 = arith.constant 0.000000e+00 : f32
    %23 = vector.broadcast %cst_9 : f32 to vector<16x1xf32>
    %24 = arith.maximumf %22, %23 : vector<16x1xf32>
    %25 = vector.broadcast %15 : vector<16x1xf32> to vector<16x128xf32>
    %26 = arith.subf %11, %25 : vector<16x128xf32>
    %cst_10 = arith.constant 9.99999996E-13 : f32
    %27 = vector.broadcast %cst_10 : f32 to vector<16x1xf32>
    %28 = arith.addf %24, %27 : vector<16x1xf32>
    %29 = math.rsqrt %28 : vector<16x1xf32>
    %30 = vector.broadcast %29 : vector<16x1xf32> to vector<16x128xf32>
    %31 = arith.mulf %26, %30 : vector<16x128xf32>
    %32 = arith.truncf %31 : vector<16x128xf32> to vector<16x128xbf16>
    %c0_11 = arith.constant 0 : index
    %c0_12 = arith.constant 0 : index
    %33 = vector.load %arg4[%c0_11, %c0_12] : memref<128x256xbf16, #tpu.memory_space<vmem>>, vector<128x256xbf16>
    %cst_13 = arith.constant dense<0.000000e+00> : vector<16x256xf32>
    %34 = tpu.matmul %32, %33, %cst_13 {dimension_numbers = #tpu.dot_dimension_numbers<[1], [0], [0], [1], [0, 0, 1, 1], [], []>} : vector<16x128xbf16>, vector<128x256xbf16>, vector<16x256xf32> -> vector<16x256xf32>
    %c0_14 = arith.constant 0 : index
    %c0_15 = arith.constant 0 : index
    %35 = vector.load %arg5[%c0_14, %c0_15] : memref<1x256xf32, #tpu.memory_space<vmem>>, vector<1x256xf32>
    %36 = vector.broadcast %35 : vector<1x256xf32> to vector<16x256xf32>
    %37 = arith.addf %34, %36 : vector<16x256xf32>
    %c0_16 = arith.constant 0 : index
    %c0_17 = arith.constant 0 : index
    %38 = vector.load %arg6[%c0_16, %c0_17] : memref<16x256xf32, #tpu.memory_space<vmem>>, vector<16x256xf32>
    tpu.vector_store %arg6[%c0_16, %c0_17], %37 {strides = array<i32>} : memref<16x256xf32, #tpu.memory_space<vmem>>, vector<16x256xf32>,
    return
  }
  func.func @transform_0(%arg0: i32) -> (i32, i32) {
    %c0_i32 = arith.constant 0 : i32
    %c0_i32_0 = arith.constant 0 : i32
    return %arg0, %c0_i32 : i32, i32
  }
  func.func @transform_1(%arg0: i32) -> (i32, i32) {
    %c0_i32 = arith.constant 0 : i32
    %c0_i32_0 = arith.constant 0 : i32
    %c0_i32_1 = arith.constant 0 : i32
    return %c0_i32, %c0_i32_0 : i32, i32
  }
  func.func @transform_2(%arg0: i32) -> (i32, i32) {
    %c0_i32 = arith.constant 0 : i32
    %c0_i32_0 = arith.constant 0 : i32
    %c0_i32_1 = arith.constant 0 : i32
    return %c0_i32, %c0_i32_0 : i32, i32
  }
  func.func @transform_3(%arg0: i32) -> (i32, i32) {
    %c0_i32 = arith.constant 0 : i32
    %c0_i32_0 = arith.constant 0 : i32
    %c0_i32_1 = arith.constant 0 : i32
    return %c0_i32, %c0_i32_0 : i32, i32
  }
  func.func @transform_4(%arg0: i32) -> (i32, i32) {
    %c0_i32 = arith.constant 0 : i32
    %c0_i32_0 = arith.constant 0 : i32
    %c0_i32_1 = arith.constant 0 : i32
    return %c0_i32, %c0_i32_0 : i32, i32
  }
  func.func @transform_5(%arg0: i32) -> (i32, i32) {
    %c0_i32 = arith.constant 0 : i32
    %c0_i32_0 = arith.constant 0 : i32
    return %arg0, %c0_i32 : i32, i32
  }
}

</mosaic_0001>

<llo_original>
// kernel: tpu_custom_call.1
$region0: #{tpu_custom_call.1}
  #allocation0 [shape = 'u32[]', space=smem, size = 0x4, offset = 0x4, fixed_abs, tag = 'smem constant byte address 0x4 - core index']
  #allocation1 [shape = 'u32[72,128]{1,0:T(1,128)}', space=vmem, size = 0x9000, scoped, tag = 'internal scratch']
  %s0 = inlined_call_operand.vmem [shape: s32[32,1], index: 0, kind: input, shape index: {}]
  %s1 = inlined_call_operand.hbm [shape: bf16[256,128], index: 1, kind: input, shape index: {}]
  %s2 = inlined_call_operand.vmem [shape: bf16[16,128], index: 2, kind: input, shape index: {}]
  %s3 = inlined_call_operand.hbm [shape: bf16[128,256], index: 3, kind: input, shape index: {}]
  %s4 = inlined_call_operand.vmem [shape: f32[1,256], index: 4, kind: input, shape index: {}]
  %s5 = inlined_call_operand.hbm [shape: f32[32,256], index: 5, kind: output, shape index: {}]
  %s6 = sld [smem:[#allocation0]]
  $region61: #{tpu_custom_call.1} parent=0
    _
  %s8 = ssub.s32 1, %s6
  %s9 = scalar_select 0, %s8, %s6
  $region1: #{tpu_custom_call.1} parent=0
    #allocation2 [shape = 'u8[65536]{0}', space=vmem, size = 0x10000, scoped, tag = 'input window, operand 1, single buffered']
    #allocation3 [shape = 's32[2]{0}', space=sflag, size = 0x8, scoped, tag = 'scoped memory for tpu_custom_call.1']
    #allocation4 [shape = 's32[2]{0}', space=sflag, size = 0x8, scoped, tag = 'scoped memory for tpu_custom_call.1']
    #allocation5 [shape = 'u8[65536]{0}', space=vmem, size = 0x10000, scoped, tag = 'input window, operand 3, single buffered']
    #allocation6 [shape = 's32[1]{0}', space=sflag, size = 0x4, scoped, tag = 'scoped memory for tpu_custom_call.1']
    #allocation7 [shape = 'u8[32768]{0}', space=vmem, size = 0x8000, scoped, tag = 'output window, operand 0']
    %10 = vsyncpa [#allocation3], 0
    %11 = vsyncpa [#allocation6], 0
    %12 = vsyncpa [#allocation4], 0
    %s13 = scalar_lea.sflag [#allocation4], 1
    %14 = vsyncpa %s13, 0
    loop: start=0, step=1, limit=4
    $region2: #{tpu_custom_call.1} parent=1 // loop_pre_header
      _
    $region3: #{tpu_custom_call.1} parent=1 // loop_header
      %s16 = sphi 0, %s20
      %p17 = scmp.ge.s32.totalorder %s16, 4
      %s26 = sphi 0, %s28
      %s29 = sphi 0, %s26
      %s30 = sphi 0, %s29
      %s46 = sphi 0, %s30
      %s50 = sphi 0, %s50
      %s52 = sphi 0, %s50
      %s53 = sphi 0, %s52
      %s67 = sphi 0, %s53
      %s71 = sphi 0, %s71
      %s73 = sphi 0, %s71
      %s74 = sphi 0, %s73
      %s88 = sphi 0, %s74
      %s92 = sphi 0, %s92
      %s94 = sphi 0, %s92
      %s95 = sphi 0, %s94
      %s109 = sphi 0, %s95
      %s113 = sphi 0, %s113
      %s115 = sphi 0, %s113
      %s116 = sphi 0, %s115
      %s130 = sphi 0, %s116
      %s136 = sphi 0, %s138
      %s139 = sphi 0, %s136
      %s140 = sphi 0, %s139
      %s156 = sphi 0, %s140
    $region4: #{tpu_custom_call.1} parent=1 // loop_header_branch
      %19 = sbr.rel (%p17) target = $region8
    $region5: #{tpu_custom_call.1} parent=1 // loop_body
      %s21 = ssub.s32 %s16, 1
      %s22 = ssub.s32 %s16, 2
      %s23 = sadd.s32 %s16, 1
      %s24 = ssub.s32 %s16, %s23
      %p25 = scmp.eq.s32.totalorder %s24, 0
      %s27 = sadd.s32 %s26, 1
      %s28 = scalar_select %p25, %s26, %s27
      %p31 = pneg %p25
      %p32 = scmp.eq.s32.totalorder %s16, 1
      %p33 = por %p31, %p32
      %p34 = scmp.ne.s32.totalorder %s26, %s29
      %p35 = scmp.eq.s32.totalorder %s16, 0
      %p36 = por %p34, %p35
      %p37 = scmp.ne.s32.totalorder %s26, %s29
      %p38 = scmp.eq.s32.totalorder %s21, 1
      %p39 = por %p37, %p38
      %p40 = scmp.ne.s32.totalorder %s29, %s30
      %p41 = scmp.eq.s32.totalorder %s21, 0
      %p42 = por %p40, %p41
      %p43 = scmp.ne.s32.totalorder %s29, %s30
      %p44 = scmp.eq.s32.totalorder %s22, 1
      %p45 = por %p43, %p44
      %p47 = scmp.ne.s32.totalorder %s30, %s46
      %p48 = scmp.eq.s32.totalorder %s22, 0
      %p49 = por %p47, %p48
      %s51 = sadd.s32 %s50, 1
      %p54 = scmp.eq.s32.totalorder %s16, 1
      %p55 = scmp.ne.s32.totalorder %s50, %s52
      %p56 = scmp.eq.s32.totalorder %s16, 0
      %p57 = por %p55, %p56
      %p58 = scmp.ne.s32.totalorder %s50, %s52
      %p59 = scmp.eq.s32.totalorder %s21, 1
      %p60 = por %p58, %p59
      %p61 = scmp.ne.s32.totalorder %s52, %s53
      %p62 = scmp.eq.s32.totalorder %s21, 0
      %p63 = por %p61, %p62
      %p64 = scmp.ne.s32.totalorder %s52, %s53
      %p65 = scmp.eq.s32.totalorder %s22, 1
      %p66 = por %p64, %p65
      %p68 = scmp.ne.s32.totalorder %s53, %s67
      %p69 = scmp.eq.s32.totalorder %s22, 0
      %p70 = por %p68, %p69
      %s72 = sadd.s32 %s71, 1
      %p75 = scmp.eq.s32.totalorder %s16, 1
      %p76 = scmp.ne.s32.totalorder %s71, %s73
      %p77 = scmp.eq.s32.totalorder %s16, 0
      %p78 = por %p76, %p77
      %p79 = scmp.ne.s32.totalorder %s71, %s73
      %p80 = scmp.eq.s32.totalorder %s21, 1
      %p81 = por %p79, %p80
      %p82 = scmp.ne.s32.totalorder %s73, %s74
      %p83 = scmp.eq.s32.totalorder %s21, 0
      %p84 = por %p82, %p83
      %p85 = scmp.ne.s32.totalorder %s73, %s74
      %p86 = scmp.eq.s32.totalorder %s22, 1
      %p87 = por %p85, %p86
      %p89 = scmp.ne.s32.totalorder %s74, %s88
      %p90 = scmp.eq.s32.totalorder %s22, 0
      %p91 = por %p89, %p90
      %s93 = sadd.s32 %s92, 1
      %p96 = scmp.eq.s32.totalorder %s16, 1
      %p97 = scmp.ne.s32.totalorder %s92, %s94
      %p98 = scmp.eq.s32.totalorder %s16, 0
      %p99 = por %p97, %p98
      %p100 = scmp.ne.s32.totalorder %s92, %s94
      %p101 = scmp.eq.s32.totalorder %s21, 1
      %p102 = por %p100, %p101
      %p103 = scmp.ne.s32.totalorder %s94, %s95
      %p104 = scmp.eq.s32.totalorder %s21, 0
      %p105 = por %p103, %p104
      %p106 = scmp.ne.s32.totalorder %s94, %s95
      %p107 = scmp.eq.s32.totalorder %s22, 1
      %p108 = por %p106, %p107
      %p110 = scmp.ne.s32.totalorder %s95, %s109
      %p111 = scmp.eq.s32.totalorder %s22, 0
      %p112 = por %p110, %p111
      %s114 = sadd.s32 %s113, 1
      %p117 = scmp.eq.s32.totalorder %s16, 1
      %p118 = scmp.ne.s32.totalorder %s113, %s115
      %p119 = scmp.eq.s32.totalorder %s16, 0
      %p120 = por %p118, %p119
      %p121 = scmp.ne.s32.totalorder %s113, %s115
      %p122 = scmp.eq.s32.totalorder %s21, 1
      %p123 = por %p121, %p122
      %p124 = scmp.ne.s32.totalorder %s115, %s116
      %p125 = scmp.eq.s32.totalorder %s21, 0
      %p126 = por %p124, %p125
      %p127 = scmp.ne.s32.totalorder %s115, %s116
      %p128 = scmp.eq.s32.totalorder %s22, 1
      %p129 = por %p127, %p128
      %p131 = scmp.ne.s32.totalorder %s116, %s130
      %p132 = scmp.eq.s32.totalorder %s22, 0
      %p133 = por %p131, %p132
      %s134 = ssub.s32 %s16, %s23
      %p135 = scmp.eq.s32.totalorder %s134, 0
      %s137 = sadd.s32 %s136, 1
      %s138 = scalar_select %p135, %s136, %s137
      %p141 = pneg %p135
      %p142 = scmp.eq.s32.totalorder %s16, 1
      %p143 = por %p141, %p142
      %p144 = scmp.ne.s32.totalorder %s136, %s139
      %p145 = scmp.eq.s32.totalorder %s16, 0
      %p146 = por %p144, %p145
      %p147 = scmp.ne.s32.totalorder %s136, %s139
      %p148 = scmp.eq.s32.totalorder %s21, 1
      %p149 = por %p147, %p148
      %p150 = scmp.ne.s32.totalorder %s139, %s140
      %p151 = scmp.eq.s32.totalorder %s21, 0
      %p152 = por %p150, %p151
      %p153 = scmp.ne.s32.totalorder %s139, %s140
      %p154 = scmp.eq.s32.totalorder %s22, 1
      %p155 = por %p153, %p154
      %p157 = scmp.ne.s32.totalorder %s140, %s156
      %p158 = scmp.eq.s32.totalorder %s22, 0
      %p159 = por %p157, %p158
      %p160 = scmp.le.s32.totalorder 1, %s16
      %p161 = scmp.lt.s32.totalorder %s16, 3
      %p162 = pnand %p160, %p161
      %p163 = pneg %p162
      // Predicated region
      $region9: #{tpu_custom_call.1} parent=5 // pred_check
        _
      $region10: #{tpu_custom_call.1} parent=5 // pred_check_branch
        %165 = sbr.rel (%p162) target = $region12
      $region11: #{tpu_custom_call.1} parent=5 // pred_region
        %s166 = ssub.s32 %s16, 1
        // Predicated region
        $region13: #{tpu_custom_call.1} parent=11 // pred_check
          %p167 = pneg %p63
        $region14: #{tpu_custom_call.1} parent=11 // pred_check_branch
          %169 = sbr.rel (%p167) target = $region16
        $region15: #{tpu_custom_call.1} parent=11 // pred_region
          %171 = vsyncadd [#allocation3], 0
          %s172 = sshll.u32 %s1, 4
          %s173 = int_to_ptr.hbm [resolvable:$true] %s172
          %s174 = sshll.u32 [#allocation2], 4
          %s175 = int_to_ptr.vmem [resolvable:$true] %s174
          %180 = dma.hbm_to_vmem [thread:$0]  %s173, 2048, %s175, [#allocation3], 64, 64, 4
        $region16: #{tpu_custom_call.1} parent=11 // pred_fallthru
          _
        // Predicated region
        $region17: #{tpu_custom_call.1} parent=11 // pred_check
          %p181 = pneg %p84
        $region18: #{tpu_custom_call.1} parent=11 // pred_check_branch
          %183 = sbr.rel (%p181) target = $region20
        $region19: #{tpu_custom_call.1} parent=11 // pred_region
          _
        $region20: #{tpu_custom_call.1} parent=11 // pred_fallthru
          _
        // Predicated region
        $region21: #{tpu_custom_call.1} parent=11 // pred_check
          %p184 = pneg %p105
        $region22: #{tpu_custom_call.1} parent=11 // pred_check_branch
          %186 = sbr.rel (%p184) target = $region24
        $region23: #{tpu_custom_call.1} parent=11 // pred_region
          %188 = vsyncadd [#allocation6], 0
          %s189 = sshll.u32 %s3, 4
          %s190 = int_to_ptr.hbm [resolvable:$true] %s189
          %s191 = sshll.u32 [#allocation5], 4
          %s192 = int_to_ptr.vmem [resolvable:$true] %s191
          %197 = dma.hbm_to_vmem [thread:$0]  %s190, 2048, %s192, [#allocation6], 128, 128, 8
        $region24: #{tpu_custom_call.1} parent=11 // pred_fallthru
          _
        // Predicated region
        $region25: #{tpu_custom_call.1} parent=11 // pred_check
          %p198 = pneg %p126
        $region26: #{tpu_custom_call.1} parent=11 // pred_check_branch
          %200 = sbr.rel (%p198) target = $region28
        $region27: #{tpu_custom_call.1} parent=11 // pred_region
          _
        $region28: #{tpu_custom_call.1} parent=11 // pred_fallthru
          _
      $region12: #{tpu_custom_call.1} parent=5 // pred_fallthru
        _
      %p201 = scmp.lt.s32.totalorder %s16, 2
      // Predicated region
      $region29: #{tpu_custom_call.1} parent=5 // pred_check
        %p202 = pneg %p201
      $region30: #{tpu_custom_call.1} parent=5 // pred_check_branch
        %204 = sbr.rel (%p202) target = $region32
      $region31: #{tpu_custom_call.1} parent=5 // pred_region
        // Predicated region
        $region33: #{tpu_custom_call.1} parent=31 // pred_check
          %p205 = pneg %p36
        $region34: #{tpu_custom_call.1} parent=31 // pred_check_branch
          %207 = sbr.rel (%p205) target = $region36
        $region35: #{tpu_custom_call.1} parent=31 // pred_region
          %s208 = smul.u32 2, %s16
          %p209 = scmp.lt.s32.totalorder %s208, 3
          %s210 = scalar_select %p209, %s208, 3
          %s211 = smul.addr %s210, 8
          %s212 = scalar_lea.vmem %s0, %s211
          %s213 = smul.u32 2, %s16
        $region36: #{tpu_custom_call.1} parent=31 // pred_fallthru
          _
      $region32: #{tpu_custom_call.1} parent=5 // pred_fallthru
        _
      %p214 = scmp.le.s32.totalorder 1, %s16
      %p215 = scmp.lt.s32.totalorder %s16, 3
      %p216 = pnand %p214, %p215
      %p217 = pneg %p216
      // Predicated region
      $region37: #{tpu_custom_call.1} parent=5 // pred_check
        _
      $region38: #{tpu_custom_call.1} parent=5 // pred_check_branch
        %219 = sbr.rel (%p216) target = $region40
      $region39: #{tpu_custom_call.1} parent=5 // pred_region
        %s220 = ssub.s32 %s16, 1
        // Predicated region
        $region41: #{tpu_custom_call.1} parent=39 // pred_check
          %p221 = pneg %p63
        $region42: #{tpu_custom_call.1} parent=39 // pred_check_branch
          %223 = sbr.rel (%p221) target = $region44
        $region43: #{tpu_custom_call.1} parent=39 // pred_region
          %225 = dma.done [#allocation3], 2048
        $region44: #{tpu_custom_call.1} parent=39 // pred_fallthru
          _
        // Predicated region
        $region45: #{tpu_custom_call.1} parent=39 // pred_check
          %p226 = pneg %p105
        $region46: #{tpu_custom_call.1} parent=39 // pred_check_branch
          %228 = sbr.rel (%p226) target = $region48
        $region47: #{tpu_custom_call.1} parent=39 // pred_region
          %230 = dma.done [#allocation6], 2048
        $region48: #{tpu_custom_call.1} parent=39 // pred_fallthru
          _
        %s231 = smul.u32 2, %s21
        %p232 = scmp.lt.s32.totalorder %s231, 3
        %s233 = scalar_select %p232, %s231, 3
        %s234 = smul.addr %s233, 8
        %s235 = scalar_lea.vmem %s0, %s234
        %p236 = pneg %p42
        %p237 = pneg %p39
        %p238 = pneg %p63
        %p239 = pneg %p60
        %p240 = pneg %p84
        %p241 = pneg %p81
        %p242 = pneg %p105
        %p243 = pneg %p102
        %p244 = pneg %p126
        %p245 = pneg %p123
        %p246 = pneg %p152
        %p247 = pneg %p149
        %s248 = sand.u32 %s139, 1
        %s249 = scalar_lea.sflag [#allocation4], %s248
        %s250 = sand.u32 %s139, 1
        %s251 = smul.addr %s250, 32
        %s252 = scalar_lea.vmem [#allocation7], %s251
        %s253 = smul.u32 2, %s21
        %p254 = scmp.lt.s32.totalorder %s253, 3
        %s255 = scalar_select %p254, %s253, 3
        %s256 = smul.addr %s255, 8
        %s257 = scalar_lea.vmem %s0, %s256
        %s258 = smul.u32 2, %s21
        %s259 = smul.u32 2, %s21
        %v260 = vld [vmem:[%s257] sm:$0xff]
        %v261 = vld [vmem:[%s257 + $0x8] sm:$0xff]
        %v262 = vlaneseq
        %v263 = vand.u32 %v262, 127
        %v264 = vadd.s32 %v263, 128
        %265 = vset.pattern.permute.xlu0 0
        %266 = vperm.xlu0 %265, %v260
        %v267 = vpop.permute.xlu0 %266
        %268 = vset.pattern.permute.xlu0 0
        %269 = vperm.xlu0 %268, %v261
        %v270 = vpop.permute.xlu0 %269
        %vm271 = vcmp.eq.s32.totalorder %v263, %v267
        %vm272 = vcmp.eq.s32.totalorder %v264, %v267
        %vm273 = vcmp.eq.s32.totalorder %v263, %v270
        %vm274 = vcmp.eq.s32.totalorder %v264, %v270
        %v275 = vsel %vm271, 1, 0
        %v276 = vsel %vm272, 1, 0
        %v277 = vsel %vm273, 1, 0
        %v278 = vsel %vm274, 1, 0
        %v279 = vcvt.s32.f32 %v275
        %v280 = vcvt.s32.f32 %v276
        %v281 = vcvt.s32.f32 %v277
        %v282 = vcvt.s32.f32 %v278
        %v283 = vpack.c.bf16 %v281, %v279
        %v284 = vpack.c.bf16 %v282, %v280
        %v285 = vld [vmem:[#allocation2] sm:$0xf]
        %v286 = vld [vmem:[#allocation2 + $0x4] sm:$0xf]
        %v287 = vld [vmem:[#allocation2 + $0x8] sm:$0xf]
        %v288 = vld [vmem:[#allocation2 + $0xc] sm:$0xf]
        %v289 = vld [vmem:[#allocation2 + $0x10] sm:$0xf]
        %v290 = vld [vmem:[#allocation2 + $0x14] sm:$0xf]
        %v291 = vld [vmem:[#allocation2 + $0x18] sm:$0xf]
        %v292 = vld [vmem:[#allocation2 + $0x1c] sm:$0xf]
        %v293 = vld [vmem:[#allocation2 + $0x20] sm:$0xf]
        %v294 = vld [vmem:[#allocation2 + $0x24] sm:$0xf]
        %v295 = vld [vmem:[#allocation2 + $0x28] sm:$0xf]
        %v296 = vld [vmem:[#allocation2 + $0x2c] sm:$0xf]
        %v297 = vld [vmem:[#allocation2 + $0x30] sm:$0xf]
        %v298 = vld [vmem:[#allocation2 + $0x34] sm:$0xf]
        %v299 = vld [vmem:[#allocation2 + $0x38] sm:$0xf]
        %v300 = vld [vmem:[#allocation2 + $0x3c] sm:$0xf]
        %v301 = vld [vmem:[#allocation2 + $0x40] sm:$0xf]
        %v302 = vld [vmem:[#allocation2 + $0x44] sm:$0xf]
        %v303 = vld [vmem:[#allocation2 + $0x48] sm:$0xf]
        %v304 = vld [vmem:[#allocation2 + $0x4c] sm:$0xf]
        %v305 = vld [vmem:[#allocation2 + $0x50] sm:$0xf]
        %v306 = vld [vmem:[#allocation2 + $0x54] sm:$0xf]
        %v307 = vld [vmem:[#allocation2 + $0x58] sm:$0xf]
        %v308 = vld [vmem:[#allocation2 + $0x5c] sm:$0xf]
        %v309 = vld [vmem:[#allocation2 + $0x60] sm:$0xf]
        %v310 = vld [vmem:[#allocation2 + $0x64] sm:$0xf]
        %v311 = vld [vmem:[#allocation2 + $0x68] sm:$0xf]
        %v312 = vld [vmem:[#allocation2 + $0x6c] sm:$0xf]
        %v313 = vld [vmem:[#allocation2 + $0x70] sm:$0xf]
        %v314 = vld [vmem:[#allocation2 + $0x74] sm:$0xf]
        %v315 = vld [vmem:[#allocation2 + $0x78] sm:$0xf]
        %v316 = vld [vmem:[#allocation2 + $0x7c] sm:$0xf]
        %v317 = vld [vmem:[%s2] sm:$0xf]
        %v318 = vld [vmem:[%s2 + $0x4] sm:$0xf]
        %v319 = vunpack.c.l.bf16 %v317
        %v320 = vunpack.c.l.bf16 %v318
        %v353 = vunpack.c.l.b16 %v285
        %v354 = vunpack.c.l.b16 %v286
        %v355 = vunpack.c.l.b16 %v287
        %v356 = vunpack.c.l.b16 %v288
        %v357 = vunpack.c.l.b16 %v289
        %v358 = vunpack.c.l.b16 %v290
        %v359 = vunpack.c.l.b16 %v291
        %v360 = vunpack.c.l.b16 %v292
        %v361 = vunpack.c.l.b16 %v293
        %v362 = vunpack.c.l.b16 %v294
        %v363 = vunpack.c.l.b16 %v295
        %v364 = vunpack.c.l.b16 %v296
        %v365 = vunpack.c.l.b16 %v297
        %v366 = vunpack.c.l.b16 %v298
        %v367 = vunpack.c.l.b16 %v299
        %v368 = vunpack.c.l.b16 %v300
        %v369 = vunpack.c.l.b16 %v301
        %v370 = vunpack.c.l.b16 %v302
        %v371 = vunpack.c.l.b16 %v303
        %v372 = vunpack.c.l.b16 %v304
        %v373 = vunpack.c.l.b16 %v305
        %v374 = vunpack.c.l.b16 %v306
        %v375 = vunpack.c.l.b16 %v307
        %v376 = vunpack.c.l.b16 %v308
        %v377 = vunpack.c.l.b16 %v309
        %v378 = vunpack.c.l.b16 %v310
        %v379 = vunpack.c.l.b16 %v311
        %v380 = vunpack.c.l.b16 %v312
        %v381 = vunpack.c.l.b16 %v313
        %v382 = vunpack.c.l.b16 %v314
        %v383 = vunpack.c.l.b16 %v315
        %v384 = vunpack.c.l.b16 %v316
        %v385 = vpack.c.b16 %v354, %v353
        %v386 = vpack.c.b16 %v356, %v355
        %v387 = vpack.c.b16 %v358, %v357
        %v388 = vpack.c.b16 %v360, %v359
        %v389 = vpack.c.b16 %v362, %v361
        %v390 = vpack.c.b16 %v364, %v363
        %v391 = vpack.c.b16 %v366, %v365
        %v392 = vpack.c.b16 %v368, %v367
        %v393 = vpack.c.b16 %v370, %v369
        %v394 = vpack.c.b16 %v372, %v371
        %v395 = vpack.c.b16 %v374, %v373
        %v396 = vpack.c.b16 %v376, %v375
        %v397 = vpack.c.b16 %v378, %v377
        %v398 = vpack.c.b16 %v380, %v379
        %v399 = vpack.c.b16 %v382, %v381
        %v400 = vpack.c.b16 %v384, %v383
        %417 = vmatpush.bf16.msra.mxu0 %v392
        %418 = vmatpush.bf16.msra.mxu0 %v391
        %419 = vmatpush.bf16.msra.mxu0 %v390
        %420 = vmatpush.bf16.msra.mxu0 %v389
        %421 = vmatpush.bf16.msra.mxu0 %v388
        %422 = vmatpush.bf16.msra.mxu0 %v387
        %423 = vmatpush.bf16.msra.mxu0 %v386
        %424 = vmatpush.bf16.msra.mxu0 %v385
        %425 = vmatmul.bf16.gmra.mxu0 %v283
        %v426 = vpop.f32.mrf.mxu0
        %v427 = vadd.f32 %v319, %v426
        %v428 = vpop.f32.mrf.mxu0
        %v429 = vadd.f32 %v320, %v428
        %430 = vdwg.mxu0
        %431 = vmatpush.bf16.msra.mxu0 %v400
        %432 = vmatpush.bf16.msra.mxu0 %v399
        %433 = vmatpush.bf16.msra.mxu0 %v398
        %434 = vmatpush.bf16.msra.mxu0 %v397
        %435 = vmatpush.bf16.msra.mxu0 %v396
        %436 = vmatpush.bf16.msra.mxu0 %v395
        %437 = vmatpush.bf16.msra.mxu0 %v394
        %438 = vmatpush.bf16.msra.mxu0 %v393
        %439 = vmatmul.bf16.gmra.mxu0 %v284
        %v440 = vpop.f32.mrf.mxu0
        %v441 = vadd.f32 %v427, %v440
        %v442 = vpop.f32.mrf.mxu0
        %v443 = vadd.f32 %v429, %v442
        %444 = vdwg.mxu0
        %445 = vadd.xlane.f32.xlu0 %v441
        %v446 = vpop.xlane.xlu0 %445
        %447 = vadd.xlane.f32.xlu0 %v443
        %v448 = vpop.xlane.xlu0 %447
        %v449 = vrcp.pop 128.0
        %v450 = vmul.f32 128.0, %v449
        %v451 = vsub.f32 1.0, %v450
        %v452 = vmul.f32 %v449, %v451
        %v453 = vadd.f32 %v449, %v452
        %vm454 = vweird.f32 %v449
        %v455 = vsel %vm454, %v449, %v453
        %v456 = vmul.f32 %v446, %v455
        %v457 = vmul.f32 %v448, %v455
        %v458 = vmul.f32 %v441, %v441
        %v459 = vmul.f32 %v443, %v443
        %460 = vadd.xlane.f32.xlu0 %v458
        %v461 = vpop.xlane.xlu0 %460
        %462 = vadd.xlane.f32.xlu0 %v459
        %v463 = vpop.xlane.xlu0 %462
        %v464 = vmul.f32 %v461, %v455
        %v465 = vmul.f32 %v463, %v455
        %v466 = vmul.f32 %v456, %v456
        %v467 = vmul.f32 %v457, %v457
        %v468 = vsub.f32 %v464, %v466
        %v469 = vsub.f32 %v465, %v467
        %v470 = vmax.f32 %v468, 0.0
        %v471 = vmax.f32 %v469, 0.0
        %v472 = vsub.f32 %v441, %v456
        %v473 = vsub.f32 %v443, %v457
        %v474 = vadd.f32 %v470, 1e-12
        %v475 = vadd.f32 %v471, 1e-12
        %v476 = vrsqrt.pop %v474
        %v477 = vmul.f32 %v476, %v474
        %v478 = vmul.f32 %v477, %v476
        %v479 = vmul.f32 0.5, %v478
        %v480 = vsub.f32 1.5, %v479
        %v481 = vmul.f32 %v476, %v480
        %vm482 = vweird.f32 %v474
        %vm483 = vweird.f32 %v476
        %vm484 = vmor %vm482, %vm483
        %v485 = vsel %vm484, %v476, %v481
        %v486 = vrsqrt.pop %v475
        %v487 = vmul.f32 %v486, %v475
        %v488 = vmul.f32 %v487, %v486
        %v489 = vmul.f32 0.5, %v488
        %v490 = vsub.f32 1.5, %v489
        %v491 = vmul.f32 %v486, %v490
        %vm492 = vweird.f32 %v475
        %vm493 = vweird.f32 %v486
        %vm494 = vmor %vm492, %vm493
        %v495 = vsel %vm494, %v486, %v491
        %v496 = vmul.f32 %v472, %v485
        %v497 = vmul.f32 %v473, %v495
        %v498 = vpack.c.bf16 %v497, %v496
        %v499 = vld [vmem:[#allocation5] sm:$0xff]
        %v500 = vld [vmem:[#allocation5 + $0x8] sm:$0xff]
        %v501 = vld [vmem:[#allocation5 + $0x10] sm:$0xff]
        %v502 = vld [vmem:[#allocation5 + $0x18] sm:$0xff]
        %v503 = vld [vmem:[#allocation5 + $0x20] sm:$0xff]
        %v504 = vld [vmem:[#allocation5 + $0x28] sm:$0xff]
        %v505 = vld [vmem:[#allocation5 + $0x30] sm:$0xff]
        %v506 = vld [vmem:[#allocation5 + $0x38] sm:$0xff]
        %v507 = vld [vmem:[#allocation5 + $0x40] sm:$0xff]
        %v508 = vld [vmem:[#allocation5 + $0x48] sm:$0xff]
        %v509 = vld [vmem:[#allocation5 + $0x50] sm:$0xff]
        %v510 = vld [vmem:[#allocation5 + $0x58] sm:$0xff]
        %v511 = vld [vmem:[#allocation5 + $0x60] sm:$0xff]
        %v512 = vld [vmem:[#allocation5 + $0x68] sm:$0xff]
        %v513 = vld [vmem:[#allocation5 + $0x70] sm:$0xff]
        %v514 = vld [vmem:[#allocation5 + $0x78] sm:$0xff]
        %v515 = vld [vmem:[%s4] sm:$0x3]
        %v517 = vperm.slane %v515, 0
        %v518 = vperm.slane %v515, 1
        %v537 = vunpack.c.l.b16 %v499
        %v538 = vunpack.c.h.b16 %v499
        %v539 = vunpack.c.l.b16 %v500
        %v540 = vunpack.c.h.b16 %v500
        %v541 = vunpack.c.l.b16 %v501
        %v542 = vunpack.c.h.b16 %v501
        %v543 = vunpack.c.l.b16 %v502
        %v544 = vunpack.c.h.b16 %v502
        %v545 = vunpack.c.l.b16 %v503
        %v546 = vunpack.c.h.b16 %v503
        %v547 = vunpack.c.l.b16 %v504
        %v548 = vunpack.c.h.b16 %v504
        %v549 = vunpack.c.l.b16 %v505
        %v550 = vunpack.c.h.b16 %v505
        %v551 = vunpack.c.l.b16 %v506
        %v552 = vunpack.c.h.b16 %v506
        %v553 = vunpack.c.l.b16 %v507
        %v554 = vunpack.c.h.b16 %v507
        %v555 = vunpack.c.l.b16 %v508
        %v556 = vunpack.c.h.b16 %v508
        %v557 = vunpack.c.l.b16 %v509
        %v558 = vunpack.c.h.b16 %v509
        %v559 = vunpack.c.l.b16 %v510
        %v560 = vunpack.c.h.b16 %v510
        %v561 = vunpack.c.l.b16 %v511
        %v562 = vunpack.c.h.b16 %v511
        %v563 = vunpack.c.l.b16 %v512
        %v564 = vunpack.c.h.b16 %v512
        %v565 = vunpack.c.l.b16 %v513
        %v566 = vunpack.c.h.b16 %v513
        %v567 = vunpack.c.l.b16 %v514
        %v568 = vunpack.c.h.b16 %v514
        %v569 = vpack.c.b16 %v539, %v537
        %v570 = vpack.c.b16 %v540, %v538
        %v571 = vpack.c.b16 %v543, %v541
        %v572 = vpack.c.b16 %v544, %v542
        %v573 = vpack.c.b16 %v547, %v545
        %v574 = vpack.c.b16 %v548, %v546
        %v575 = vpack.c.b16 %v551, %v549
        %v576 = vpack.c.b16 %v552, %v550
        %v577 = vpack.c.b16 %v555, %v553
        %v578 = vpack.c.b16 %v556, %v554
        %v579 = vpack.c.b16 %v559, %v557
        %v580 = vpack.c.b16 %v560, %v558
        %v581 = vpack.c.b16 %v563, %v561
        %v582 = vpack.c.b16 %v564, %v562
        %v583 = vpack.c.b16 %v567, %v565
        %v584 = vpack.c.b16 %v568, %v566
        %601 = vmatpush.bf16.msra.mxu0 %v583
        %602 = vmatpush.bf16.msra.mxu0 %v581
        %603 = vmatpush.bf16.msra.mxu0 %v579
        %604 = vmatpush.bf16.msra.mxu0 %v577
        %605 = vmatpush.bf16.msra.mxu0 %v575
        %606 = vmatpush.bf16.msra.mxu0 %v573
        %607 = vmatpush.bf16.msra.mxu0 %v571
        %608 = vmatpush.bf16.msra.mxu0 %v569
        %609 = vmatmul.bf16.gmra.mxu0 %v498
        %v610 = vpop.f32.mrf.mxu0
        %v611 = vadd.f32 %v517, %v610
        %v612 = vpop.f32.mrf.mxu0
        %v613 = vadd.f32 %v517, %v612
        %614 = vdwg.mxu0
        %615 = vmatpush.bf16.msra.mxu0 %v584
        %616 = vmatpush.bf16.msra.mxu0 %v582
        %617 = vmatpush.bf16.msra.mxu0 %v580
        %618 = vmatpush.bf16.msra.mxu0 %v578
        %619 = vmatpush.bf16.msra.mxu0 %v576
        %620 = vmatpush.bf16.msra.mxu0 %v574
        %621 = vmatpush.bf16.msra.mxu0 %v572
        %622 = vmatpush.bf16.msra.mxu0 %v570
        %623 = vmatmul.bf16.gmra.mxu0 %v498
        %v624 = vpop.f32.mrf.mxu0
        %v625 = vadd.f32 %v518, %v624
        %v626 = vpop.f32.mrf.mxu0
        %v627 = vadd.f32 %v518, %v626
        %628 = vdwg.mxu0
        %629 = vst [vmem:[%s252] sm:$0xff] %v611
        %630 = vst [vmem:[%s252 + $0x8] sm:$0xff] %v625
        %631 = vst [vmem:[%s252 + $0x10] sm:$0xff] %v613
        %632 = vst [vmem:[%s252 + $0x18] sm:$0xff] %v627
        %s633 = sand.u32 %s139, 1
        %s634 = scalar_lea.sflag [#allocation4], %s633
        %s635 = sand.u32 %s139, 1
        %s636 = smul.addr %s635, 32
        %s637 = scalar_lea.vmem [#allocation7], %s636
        // Predicated region
        $region49: #{tpu_custom_call.1} parent=39 // pred_check
          %p638 = pneg %p149
        $region50: #{tpu_custom_call.1} parent=39 // pred_check_branch
          %640 = sbr.rel (%p638) target = $region52
        $region51: #{tpu_custom_call.1} parent=39 // pred_region
          %s641 = smul.u32 2, %s21
          %643 = vsyncadd %s634, 0
          %s644 = smul.addr %s641, 2
          %s645 = smul.addr %s644, 8
          %s646 = scalar_lea.hbm %s5, %s645
          %s647 = sshll.u32 %s637, 4
          %s648 = int_to_ptr.vmem [resolvable:$true] %s647
          %s649 = sshll.u32 %s646, 4
          %s650 = int_to_ptr.hbm [resolvable:$true] %s649
          %655 = dma.vmem_to_hbm [thread:$0]  %s648, 512, %s650, %s634, 256, 256, 16
        $region52: #{tpu_custom_call.1} parent=39 // pred_fallthru
          _
      $region40: #{tpu_custom_call.1} parent=5 // pred_fallthru
        _
      %p656 = scmp.le.s32.totalorder 2, %s16
      // Predicated region
      $region53: #{tpu_custom_call.1} parent=5 // pred_check
        %p657 = pneg %p656
      $region54: #{tpu_custom_call.1} parent=5 // pred_check_branch
        %659 = sbr.rel (%p657) target = $region56
      $region55: #{tpu_custom_call.1} parent=5 // pred_region
        %s660 = ssub.s32 %s16, 2
        // Predicated region
        $region57: #{tpu_custom_call.1} parent=55 // pred_check
          %p661 = pneg %p155
        $region58: #{tpu_custom_call.1} parent=55 // pred_check_branch
          %663 = sbr.rel (%p661) target = $region60
        $region59: #{tpu_custom_call.1} parent=55 // pred_region
          %s664 = sand.u32 %s140, 1
          %s665 = scalar_lea.sflag [#allocation4], %s664
          %s666 = sand.u32 %s140, 1
          %s667 = smul.addr %s666, 32
          %s668 = scalar_lea.vmem [#allocation7], %s667
          %670 = dma.done %s665, 512
        $region60: #{tpu_custom_call.1} parent=55 // pred_fallthru
          _
      $region56: #{tpu_custom_call.1} parent=5 // pred_fallthru
        _
    $region6: #{tpu_custom_call.1} parent=1 // loop_footer
      %s20 = sadd.s32 1, %s16
    $region7: #{tpu_custom_call.1} parent=1 // loop_footer_branch
      %15 = sbr.rel target = $region3
    $region8: #{tpu_custom_call.1} parent=1 // loop_exit
      _
    %671 = vsyncpa [#allocation3], 1
    %s672 = scalar_lea.sflag [#allocation3], 1
    %673 = vsyncpa %s672, 1
    %674 = vsyncpa [#allocation6], 1
    %675 = vsyncpa [#allocation4], 1
    %s676 = scalar_lea.sflag [#allocation4], 1
    %677 = vsyncpa %s676, 1

</llo_original>
